<compile_context>
chip_gen: v5e
topology: v5e:2x2
jax: 0.10.0
libtpu: 0.0.40
codegen_flags: <defaults>
</compile_context>

<pallas_src>
import functools

import jax
import jax.numpy as jnp
from jax.experimental import pallas as pl
from jax.experimental.pallas import tpu as pltpu


def _round_up(x, m):
    return (x + m - 1) // m * m


def _lane_fold(x, lanes=128):
    """Fold (C, T) lane-wise into (C, lanes) with pure VPU adds. T % lanes == 0."""
    acc = x[:, :lanes]
    for j in range(1, x.shape[1] // lanes):
        acc = acc + x[:, j * lanes:(j + 1) * lanes]
    return acc


def _dc_topk_kernel(logits_ref, tgt_ref, ce_ref, tp_ref, psum_ref, cnt_ref,
                    *, hw_valid, needs_mask):
    """One (batch, voxel-tile) grid point.

    logits_ref : (C, T)  native dtype   (channels on sublanes, voxels on lanes)
    tgt_ref    : (1, T)  int32
    ce_ref     : (1, T)  f32             per-voxel cross entropy
    tp/psum/cnt_ref : (C, 128) f32       lane-dense partial accumulators
                                         (revisited across the voxel-tile axis)
    """
    i = pl.program_id(1)

    @pl.when(i == 0)
    def _init():
        tp_ref[...] = jnp.zeros_like(tp_ref)
        psum_ref[...] = jnp.zeros_like(psum_ref)
        cnt_ref[...] = jnp.zeros_like(cnt_ref)

    logits = logits_ref[...].astype(jnp.float32)        # (C, T)
    tgt = tgt_ref[...]                                   # (1, T) i32
    C, T = logits.shape

    # numerically stable softmax over the channel (sublane) axis
    m = jnp.max(logits, axis=0, keepdims=True)           # (1, T)
    e = jnp.exp(logits - m)                               # (C, T)  EUP
    s = jnp.sum(e, axis=0, keepdims=True)                 # (1, T)
    inv_s = pl.reciprocal(s, approx=True)                 # EUP slot
    inv_s = inv_s * (2.0 - s * inv_s)                     # one Newton step -> f32 accurate
    p = e * inv_s                                          # softmax probabilities

    # one-hot of the target labels along the channel axis
    ch = jax.lax.broadcasted_iota(jnp.int32, (C, T), 0)
    onehot = (ch == tgt).astype(jnp.float32)               # (C, T)

    # mask out padded voxels (only present when H*W was padded to the tile)
    if needs_mask:
        lane = jax.lax.broadcasted_iota(jnp.int32, (1, T), 1)
        valid = ((i * T + lane) < hw_valid).astype(jnp.float32)   # (1, T)
        onehot_m = onehot * valid
        p_m = p * valid
    else:
        onehot_m = onehot
        p_m = p

    po = p * onehot_m                                       # (C, T)

    # lane-dense partial dice statistics (fp/fn derived in the wrapper)
    tp_ref[...] += _lane_fold(po)
    psum_ref[...] += _lane_fold(p_m)
    cnt_ref[...] += _lane_fold(onehot_m)

    # exact per-voxel cross entropy: logsumexp(logits) - logit[target]
    lse = m + jnp.log(s)                                             # (1, T)
    tgt_logit = jnp.sum(logits * onehot, axis=0, keepdims=True)      # (1, T)
    ce_ref[...] = lse - tgt_logit


def _run_kernel(logits_bcn, target_b1n, *, tile_hw, hw_valid):
    B, C, HW_pad = logits_bcn.shape
    n_tiles = HW_pad // tile_hw
    needs_mask = HW_pad != hw_valid

    kernel = functools.partial(_dc_topk_kernel,
                               hw_valid=hw_valid, needs_mask=needs_mask)

    ce, tp, psum, cnt = pl.pallas_call(
        kernel,
        out_shape=(
            jax.ShapeDtypeStruct((B, 1, HW_pad), jnp.float32),   # per-voxel CE
            jax.ShapeDtypeStruct((B, C, 128), jnp.float32),       # tp partials
            jax.ShapeDtypeStruct((B, C, 128), jnp.float32),       # sum(p) partials
            jax.ShapeDtypeStruct((B, C, 128), jnp.float32),       # label-count partials
        ),
        grid_spec=pltpu.PrefetchScalarGridSpec(
            num_scalar_prefetch=0,
            grid=(B, n_tiles),
            in_specs=[
                pl.BlockSpec((pl.Squeezed(), C, tile_hw), lambda b, i: (b, 0, i)),
                pl.BlockSpec((pl.Squeezed(), 1, tile_hw), lambda b, i: (b, 0, i)),
            ],
            out_specs=[
                pl.BlockSpec((pl.Squeezed(), 1, tile_hw), lambda b, i: (b, 0, i)),
                pl.BlockSpec((pl.Squeezed(), C, 128), lambda b, i: (b, 0, 0)),
                pl.BlockSpec((pl.Squeezed(), C, 128), lambda b, i: (b, 0, 0)),
                pl.BlockSpec((pl.Squeezed(), C, 128), lambda b, i: (b, 0, 0)),
            ],
        ),
        compiler_params=pltpu.CompilerParams(
            dimension_semantics=("parallel", "arbitrary"),
        ),
    )(logits_bcn, target_b1n)
    return ce, tp, psum, cnt


@functools.partial(jax.jit, static_argnames=("weight_ce", "weight_dice",
                                             "smooth", "do_bg", "k", "tile_hw"))
def dc_and_topk_loss(net_output, target, *, weight_ce=1.0, weight_dice=1.0,
                     smooth=1e-5, do_bg=False, k=10, tile_hw=8192):
    """net_output: (B, C, H, W) logits (any float dtype).
    target: (B, 1, H, W) integer class labels.
    ignore_label is not supported (matches the stated module configuration)."""
    B, C, H, W = net_output.shape
    HW = H * W

    # free reshapes -- no transpose / no dtype upcast in the HBM path
    logits = net_output.reshape(B, C, HW)
    tgt = target.reshape(B, 1, HW).astype(jnp.int32)

    # tile the voxel axis; pad (and mask in-kernel) if HW is not a multiple
    t = min(tile_hw, _round_up(HW, 128))
    hw_pad = _round_up(HW, t)
    if hw_pad != HW:
        logits = jnp.pad(logits, ((0, 0), (0, 0), (0, hw_pad - HW)))
        tgt = jnp.pad(tgt, ((0, 0), (0, 0), (0, hw_pad - HW)))

    ce, tp_p, psum_p, cnt_p = _run_kernel(logits, tgt, tile_hw=t, hw_valid=HW)

    # ---- SoftDiceLoss (batch_dice=True -> reduce over batch + spatial) ----
    tp = jnp.sum(tp_p, axis=(0, 2))          # (C,)
    psum = jnp.sum(psum_p, axis=(0, 2))
    cnt = jnp.sum(cnt_p, axis=(0, 2))
    fp = psum - tp
    fn = cnt - tp
    nominator = 2.0 * tp + smooth
    denominator = jnp.clip(2.0 * tp + fp + fn + smooth, 1e-8)
    dc = nominator / denominator
    if not do_bg:
        dc = dc[1:]                          # drop background channel
    dc_loss = -jnp.mean(dc)

    # ---- TopKLoss: mean of the largest k% per-voxel CE values ----
    ce_valid = ce[:, :, :HW].reshape(-1)     # drop padded voxels
    n_total = B * HW
    n_keep = max(1, int(n_total * k / 100))
    # TODO(synk): torch.topk selection has no in-kernel Pallas equivalent; done
    # with jax.lax.top_k here (exact). For production-scale N a histogram /
    # threshold selection would avoid the full sort.
    topk_vals, _ = jax.lax.top_k(ce_valid, n_keep)
    ce_loss = jnp.mean(topk_vals)

    return weight_ce * ce_loss + weight_dice * dc_loss


if __name__ == "__main__":
    key = jax.random.PRNGKey(0)
    k_logits, k_target = jax.random.split(key)

    B, C, H, W = 2, 4, 16, 16
    net_output = jax.random.normal(k_logits, (B, C, H, W), dtype=jnp.float32)
    target = jax.random.randint(k_target, (B, 1, H, W), 0, C, dtype=jnp.int32)

    loss = dc_and_topk_loss(net_output, target)
    jax.block_until_ready(loss)
    assert loss.shape == () and jnp.isfinite(loss)
    print("KERNEL_OK")
</pallas_src>

<mosaic_0001>
module attributes {stable_mosaic.version = 11 : i64} {
  func.func @_dc_topk_kernel(%arg0: i32, %arg1: i32, %arg2: memref<1x4x256xf32, #tpu.memory_space<vmem>>, %arg3: memref<1x1x256xi32, #tpu.memory_space<vmem>>, %arg4: memref<1x1x256xf32, #tpu.memory_space<vmem>>, %arg5: memref<1x4x128xf32, #tpu.memory_space<vmem>>, %arg6: memref<1x4x128xf32, #tpu.memory_space<vmem>>, %arg7: memref<1x4x128xf32, #tpu.memory_space<vmem>>) attributes {dimension_semantics = [#tpu.dimension_semantics<parallel>, #tpu.dimension_semantics<arbitrary>], iteration_bounds = array<i64: 2, 1>, scalar_prefetch = 0 : i64, scratch_operands = 0 : i64, tpu.core_type = #tpu.core_type<tc>, window_params = [{transform_indices = @transform_0, window_bounds = array<i64: 1, 4, 256>}, {transform_indices = @transform_1, window_bounds = array<i64: 1, 1, 256>}, {transform_indices = @transform_2, window_bounds = array<i64: 1, 1, 256>}, {transform_indices = @transform_3, window_bounds = array<i64: 1, 4, 128>}, {transform_indices = @transform_4, window_bounds = array<i64: 1, 4, 128>}, {transform_indices = @transform_5, window_bounds = array<i64: 1, 4, 128>}]} {
    %c0_i32 = arith.constant 0 : i32
    %0 = arith.cmpi eq, %arg1, %c0_i32 : i32
    %1 = arith.extui %0 : i1 to i32
    %c0_i32_0 = arith.constant 0 : i32
    %2 = arith.cmpi ne, %1, %c0_i32_0 : i32
    scf.if %2 {
      %cst_30 = arith.constant 0.000000e+00 : f32
      %63 = vector.broadcast %cst_30 : f32 to vector<4x128xf32>
      %c0_31 = arith.constant 0 : index
      %c0_32 = arith.constant 0 : index
      %c0_33 = arith.constant 0 : index
      %64 = vector.load %arg5[%c0_31, %c0_32, %c0_33] : memref<1x4x128xf32, #tpu.memory_space<vmem>>, vector<1x4x128xf32>
      %65 = vector.shape_cast %64 : vector<1x4x128xf32> to vector<4x128xf32>
      %66 = vector.shape_cast %63 : vector<4x128xf32> to vector<1x4x128xf32>
      tpu.vector_store %arg5[%c0_31, %c0_32, %c0_33], %66 {strides = array<i32>} : memref<1x4x128xf32, #tpu.memory_space<vmem>>, vector<1x4x128xf32>,
      %cst_34 = arith.constant 0.000000e+00 : f32
      %67 = vector.broadcast %cst_34 : f32 to vector<4x128xf32>
      %c0_35 = arith.constant 0 : index
      %c0_36 = arith.constant 0 : index
      %c0_37 = arith.constant 0 : index
      %68 = vector.load %arg6[%c0_35, %c0_36, %c0_37] : memref<1x4x128xf32, #tpu.memory_space<vmem>>, vector<1x4x128xf32>
      %69 = vector.shape_cast %68 : vector<1x4x128xf32> to vector<4x128xf32>
      %70 = vector.shape_cast %67 : vector<4x128xf32> to vector<1x4x128xf32>
      tpu.vector_store %arg6[%c0_35, %c0_36, %c0_37], %70 {strides = array<i32>} : memref<1x4x128xf32, #tpu.memory_space<vmem>>, vector<1x4x128xf32>,
      %cst_38 = arith.constant 0.000000e+00 : f32
      %71 = vector.broadcast %cst_38 : f32 to vector<4x128xf32>
      %c0_39 = arith.constant 0 : index
      %c0_40 = arith.constant 0 : index
      %c0_41 = arith.constant 0 : index
      %72 = vector.load %arg7[%c0_39, %c0_40, %c0_41] : memref<1x4x128xf32, #tpu.memory_space<vmem>>, vector<1x4x128xf32>
      %73 = vector.shape_cast %72 : vector<1x4x128xf32> to vector<4x128xf32>
      %74 = vector.shape_cast %71 : vector<4x128xf32> to vector<1x4x128xf32>
      tpu.vector_store %arg7[%c0_39, %c0_40, %c0_41], %74 {strides = array<i32>} : memref<1x4x128xf32, #tpu.memory_space<vmem>>, vector<1x4x128xf32>,
    } else {
    }
    %c0 = arith.constant 0 : index
    %c0_1 = arith.constant 0 : index
    %c0_2 = arith.constant 0 : index
    %3 = vector.load %arg2[%c0, %c0_1, %c0_2] : memref<1x4x256xf32, #tpu.memory_space<vmem>>, vector<1x4x256xf32>
    %4 = vector.shape_cast %3 : vector<1x4x256xf32> to vector<4x256xf32>
    %c0_3 = arith.constant 0 : index
    %c0_4 = arith.constant 0 : index
    %c0_5 = arith.constant 0 : index
    %5 = vector.load %arg3[%c0_3, %c0_4, %c0_5] : memref<1x1x256xi32, #tpu.memory_space<vmem>>, vector<1x1x256xi32>
    %6 = vector.shape_cast %5 : vector<1x1x256xi32> to vector<1x256xi32>
    %cst = arith.constant dense<0xFF800000> : vector<256xf32>
    %7 = vector.multi_reduction <maximumf>, %4, %cst [0] : vector<4x256xf32> to vector<256xf32>
    %8 = vector.shape_cast %7 : vector<256xf32> to vector<1x256xf32>
    %9 = vector.broadcast %8 : vector<1x256xf32> to vector<4x256xf32>
    %10 = arith.subf %4, %9 : vector<4x256xf32>
    %11 = math.exp %10 : vector<4x256xf32>
    %cst_6 = arith.constant dense<0.000000e+00> : vector<256xf32>
    %12 = vector.multi_reduction <add>, %11, %cst_6 [0] : vector<4x256xf32> to vector<256xf32>
    %13 = vector.shape_cast %12 : vector<256xf32> to vector<1x256xf32>
    %14 = tpu.reciprocal %13 {approx = true} : vector<1x256xf32> -> vector<1x256xf32>
    %15 = arith.mulf %13, %14 : vector<1x256xf32>
    %cst_7 = arith.constant 2.000000e+00 : f32
    %16 = vector.broadcast %cst_7 : f32 to vector<1x256xf32>
    %17 = arith.subf %16, %15 : vector<1x256xf32>
    %18 = arith.mulf %14, %17 : vector<1x256xf32>
    %19 = vector.broadcast %18 : vector<1x256xf32> to vector<4x256xf32>
    %20 = arith.mulf %11, %19 : vector<4x256xf32>
    %21 = tpu.iota {dimensions = array<i32: 0>} : vector<4x256xi32>
    %22 = vector.broadcast %6 : vector<1x256xi32> to vector<4x256xi32>
    %23 = arith.cmpi eq, %21, %22 : vector<4x256xi32>
    %24 = arith.extui %23 : vector<4x256xi1> to vector<4x256xi32>
    %25 = arith.sitofp %24 : vector<4x256xi32> to vector<4x256xf32>
    %26 = arith.mulf %20, %25 : vector<4x256xf32>
    %c0_8 = arith.constant 0 : index
    %c0_9 = arith.constant 0 : index
    %c0_10 = arith.constant 0 : index
    %27 = vector.load %arg5[%c0_8, %c0_9, %c0_10] : memref<1x4x128xf32, #tpu.memory_space<vmem>>, vector<1x4x128xf32>
    %28 = vector.shape_cast %27 : vector<1x4x128xf32> to vector<4x128xf32>
    %29 = vector.extract_strided_slice %26 {offsets = [0, 0], sizes = [4, 128], strides = [1, 1]} : vector<4x256xf32> to vector<4x128xf32>
    %30 = vector.extract_strided_slice %26 {offsets = [0, 128], sizes = [4, 128], strides = [1, 1]} : vector<4x256xf32> to vector<4x128xf32>
    %31 = arith.addf %29, %30 : vector<4x128xf32>
    %32 = arith.addf %28, %31 : vector<4x128xf32>
    %c0_11 = arith.constant 0 : index
    %c0_12 = arith.constant 0 : index
    %c0_13 = arith.constant 0 : index
    %33 = vector.load %arg5[%c0_11, %c0_12, %c0_13] : memref<1x4x128xf32, #tpu.memory_space<vmem>>, vector<1x4x128xf32>
    %34 = vector.shape_cast %33 : vector<1x4x128xf32> to vector<4x128xf32>
    %35 = vector.shape_cast %32 : vector<4x128xf32> to vector<1x4x128xf32>
    tpu.vector_store %arg5[%c0_11, %c0_12, %c0_13], %35 {strides = array<i32>} : memref<1x4x128xf32, #tpu.memory_space<vmem>>, vector<1x4x128xf32>,
    %c0_14 = arith.constant 0 : index
    %c0_15 = arith.constant 0 : index
    %c0_16 = arith.constant 0 : index
    %36 = vector.load %arg6[%c0_14, %c0_15, %c0_16] : memref<1x4x128xf32, #tpu.memory_space<vmem>>, vector<1x4x128xf32>
    %37 = vector.shape_cast %36 : vector<1x4x128xf32> to vector<4x128xf32>
    %38 = vector.extract_strided_slice %20 {offsets = [0, 0], sizes = [4, 128], strides = [1, 1]} : vector<4x256xf32> to vector<4x128xf32>
    %39 = vector.extract_strided_slice %20 {offsets = [0, 128], sizes = [4, 128], strides = [1, 1]} : vector<4x256xf32> to vector<4x128xf32>
    %40 = arith.addf %38, %39 : vector<4x128xf32>
    %41 = arith.addf %37, %40 : vector<4x128xf32>
    %c0_17 = arith.constant 0 : index
    %c0_18 = arith.constant 0 : index
    %c0_19 = arith.constant 0 : index
    %42 = vector.load %arg6[%c0_17, %c0_18, %c0_19] : memref<1x4x128xf32, #tpu.memory_space<vmem>>, vector<1x4x128xf32>
    %43 = vector.shape_cast %42 : vector<1x4x128xf32> to vector<4x128xf32>
    %44 = vector.shape_cast %41 : vector<4x128xf32> to vector<1x4x128xf32>
    tpu.vector_store %arg6[%c0_17, %c0_18, %c0_19], %44 {strides = array<i32>} : memref<1x4x128xf32, #tpu.memory_space<vmem>>, vector<1x4x128xf32>,
    %c0_20 = arith.constant 0 : index
    %c0_21 = arith.constant 0 : index
    %c0_22 = arith.constant 0 : index
    %45 = vector.load %arg7[%c0_20, %c0_21, %c0_22] : memref<1x4x128xf32, #tpu.memory_space<vmem>>, vector<1x4x128xf32>
    %46 = vector.shape_cast %45 : vector<1x4x128xf32> to vector<4x128xf32>
    %47 = vector.extract_strided_slice %25 {offsets = [0, 0], sizes = [4, 128], strides = [1, 1]} : vector<4x256xf32> to vector<4x128xf32>
    %48 = vector.extract_strided_slice %25 {offsets = [0, 128], sizes = [4, 128], strides = [1, 1]} : vector<4x256xf32> to vector<4x128xf32>
    %49 = arith.addf %47, %48 : vector<4x128xf32>
    %50 = arith.addf %46, %49 : vector<4x128xf32>
    %c0_23 = arith.constant 0 : index
    %c0_24 = arith.constant 0 : index
    %c0_25 = arith.constant 0 : index
    %51 = vector.load %arg7[%c0_23, %c0_24, %c0_25] : memref<1x4x128xf32, #tpu.memory_space<vmem>>, vector<1x4x128xf32>
    %52 = vector.shape_cast %51 : vector<1x4x128xf32> to vector<4x128xf32>
    %53 = vector.shape_cast %50 : vector<4x128xf32> to vector<1x4x128xf32>
    tpu.vector_store %arg7[%c0_23, %c0_24, %c0_25], %53 {strides = array<i32>} : memref<1x4x128xf32, #tpu.memory_space<vmem>>, vector<1x4x128xf32>,
    %54 = math.log %13 : vector<1x256xf32>
    %55 = arith.addf %8, %54 : vector<1x256xf32>
    %56 = arith.mulf %4, %25 : vector<4x256xf32>
    %cst_26 = arith.constant dense<0.000000e+00> : vector<256xf32>
    %57 = vector.multi_reduction <add>, %56, %cst_26 [0] : vector<4x256xf32> to vector<256xf32>
    %58 = vector.shape_cast %57 : vector<256xf32> to vector<1x256xf32>
    %59 = arith.subf %55, %58 : vector<1x256xf32>
    %c0_27 = arith.constant 0 : index
    %c0_28 = arith.constant 0 : index
    %c0_29 = arith.constant 0 : index
    %60 = vector.load %arg4[%c0_27, %c0_28, %c0_29] : memref<1x1x256xf32, #tpu.memory_space<vmem>>, vector<1x1x256xf32>
    %61 = vector.shape_cast %60 : vector<1x1x256xf32> to vector<1x256xf32>
    %62 = vector.shape_cast %59 : vector<1x256xf32> to vector<1x1x256xf32>
    tpu.vector_store %arg4[%c0_27, %c0_28, %c0_29], %62 {strides = array<i32>} : memref<1x1x256xf32, #tpu.memory_space<vmem>>, vector<1x1x256xf32>,
    return
  }
  func.func @transform_0(%arg0: i32, %arg1: i32) -> (i32, i32, i32) {
    %c0_i32 = arith.constant 0 : i32
    %c0_i32_0 = arith.constant 0 : i32
    return %arg0, %c0_i32, %arg1 : i32, i32, i32
  }
  func.func @transform_1(%arg0: i32, %arg1: i32) -> (i32, i32, i32) {
    %c0_i32 = arith.constant 0 : i32
    %c0_i32_0 = arith.constant 0 : i32
    return %arg0, %c0_i32, %arg1 : i32, i32, i32
  }
  func.func @transform_2(%arg0: i32, %arg1: i32) -> (i32, i32, i32) {
    %c0_i32 = arith.constant 0 : i32
    %c0_i32_0 = arith.constant 0 : i32
    return %arg0, %c0_i32, %arg1 : i32, i32, i32
  }
  func.func @transform_3(%arg0: i32, %arg1: i32) -> (i32, i32, i32) {
    %c0_i32 = arith.constant 0 : i32
    %c0_i32_0 = arith.constant 0 : i32
    %c0_i32_1 = arith.constant 0 : i32
    return %arg0, %c0_i32, %c0_i32_0 : i32, i32, i32
  }
  func.func @transform_4(%arg0: i32, %arg1: i32) -> (i32, i32, i32) {
    %c0_i32 = arith.constant 0 : i32
    %c0_i32_0 = arith.constant 0 : i32
    %c0_i32_1 = arith.constant 0 : i32
    return %arg0, %c0_i32, %c0_i32_0 : i32, i32, i32
  }
  func.func @transform_5(%arg0: i32, %arg1: i32) -> (i32, i32, i32) {
    %c0_i32 = arith.constant 0 : i32
    %c0_i32_0 = arith.constant 0 : i32
    %c0_i32_1 = arith.constant 0 : i32
    return %arg0, %c0_i32, %c0_i32_0 : i32, i32, i32
  }
}

</mosaic_0001>

<llo_original>
// kernel: dc_and_topk_loss.1
$region0: #{dc_and_topk_loss.1}
  #allocation0 [shape = 'u32[]', space=smem, size = 0x4, offset = 0x4, fixed_abs, tag = 'smem constant byte address 0x4 - core index']
  #allocation1 [shape = 'u32[72,128]{1,0:T(1,128)}', space=vmem, size = 0x9000, scoped, tag = 'internal scratch']
  %s0 = inlined_call_operand.vmem [shape: f32[2,4,256], index: 0, kind: input, shape index: {}]
  %s1 = inlined_call_operand.vmem [shape: s32[2,1,256], index: 1, kind: input, shape index: {}]
  %s2 = inlined_call_operand.vmem [shape: f32[2,1,256], index: 2, kind: output, shape index: {0}]
  %s3 = inlined_call_operand.vmem [shape: f32[2,4,128], index: 3, kind: output, shape index: {1}]
  %s4 = inlined_call_operand.vmem [shape: f32[2,4,128], index: 4, kind: output, shape index: {2}]
  %s5 = inlined_call_operand.vmem [shape: f32[2,4,128], index: 5, kind: output, shape index: {3}]
  %6 = xla_tuple %s2, %s3, %s4, %s5
  %s7 = sld [smem:[#allocation0]]
  $region69: #{dc_and_topk_loss.1} parent=0
    _
  %s9 = ssub.s32 1, %s7
  %s10 = scalar_select 0, %s9, %s7
  loop: start=0, step=1, limit=4
  $region2: #{dc_and_topk_loss.1} parent=0 // loop_pre_header
    _
  $region3: #{dc_and_topk_loss.1} parent=0 // loop_header
    %s12 = sphi 0, %s16
    %p13 = scmp.ge.s32.totalorder %s12, 4
    %s19 = sphi 0, %s31
    %s20 = sphi 0, %s27
    %s21 = sphi 0, %s19
    %s22 = sphi 0, %s20
    %s23 = sphi 0, %s21
    %s24 = sphi 0, %s22
    %s36 = sphi 0, %s38
    %s39 = sphi 0, %s36
    %s40 = sphi 0, %s39
    %s56 = sphi 0, %s40
    %s64 = sphi 0, %s66
    %s67 = sphi 0, %s64
    %s68 = sphi 0, %s67
    %s84 = sphi 0, %s68
    %s92 = sphi 0, %s94
    %s95 = sphi 0, %s92
    %s96 = sphi 0, %s95
    %s112 = sphi 0, %s96
    %s118 = sphi 0, %s120
    %s121 = sphi 0, %s118
    %s122 = sphi 0, %s121
    %s138 = sphi 0, %s122
    %s144 = sphi 0, %s146
    %s147 = sphi 0, %s144
    %s148 = sphi 0, %s147
    %s164 = sphi 0, %s148
    %s170 = sphi 0, %s172
    %s173 = sphi 0, %s170
    %s174 = sphi 0, %s173
    %s190 = sphi 0, %s174
  $region4: #{dc_and_topk_loss.1} parent=0 // loop_header_branch
    %15 = sbr.rel (%p13) target = $region8
  $region5: #{dc_and_topk_loss.1} parent=0 // loop_body
    %s17 = ssub.s32 %s12, 1
    %s18 = ssub.s32 %s12, 2
    %s25 = sadd.s32 1, %s20
    %p26 = scmp.ge.s32.totalorder %s25, 1
    %s27 = scalar_select %p26, 0, %s25
    %s28 = sadd.s32 1, %s19
    %s29 = scalar_select %p26, %s28, %s19
    %p30 = scmp.ge.s32.totalorder %s29, 2
    %s31 = scalar_select %p30, 0, %s29
    %s32 = ssub.s32 %s19, %s31
    %s33 = ssub.s32 %s20, %s27
    %s34 = sor.u32 %s32, %s33
    %p35 = scmp.eq.s32.totalorder %s34, 0
    %s37 = sadd.s32 %s36, 1
    %s38 = scalar_select %p35, %s36, %s37
    %p41 = pneg %p35
    %p42 = scmp.eq.s32.totalorder %s12, 1
    %p43 = por %p41, %p42
    %p44 = scmp.ne.s32.totalorder %s36, %s39
    %p45 = scmp.eq.s32.totalorder %s12, 0
    %p46 = por %p44, %p45
    %p47 = scmp.ne.s32.totalorder %s36, %s39
    %p48 = scmp.eq.s32.totalorder %s17, 1
    %p49 = por %p47, %p48
    %p50 = scmp.ne.s32.totalorder %s39, %s40
    %p51 = scmp.eq.s32.totalorder %s17, 0
    %p52 = por %p50, %p51
    %p53 = scmp.ne.s32.totalorder %s39, %s40
    %p54 = scmp.eq.s32.totalorder %s18, 1
    %p55 = por %p53, %p54
    %p57 = scmp.ne.s32.totalorder %s40, %s56
    %p58 = scmp.eq.s32.totalorder %s18, 0
    %p59 = por %p57, %p58
    %s60 = ssub.s32 %s19, %s31
    %s61 = ssub.s32 %s20, %s27
    %s62 = sor.u32 %s60, %s61
    %p63 = scmp.eq.s32.totalorder %s62, 0
    %s65 = sadd.s32 %s64, 1
    %s66 = scalar_select %p63, %s64, %s65
    %p69 = pneg %p63
    %p70 = scmp.eq.s32.totalorder %s12, 1
    %p71 = por %p69, %p70
    %p72 = scmp.ne.s32.totalorder %s64, %s67
    %p73 = scmp.eq.s32.totalorder %s12, 0
    %p74 = por %p72, %p73
    %p75 = scmp.ne.s32.totalorder %s64, %s67
    %p76 = scmp.eq.s32.totalorder %s17, 1
    %p77 = por %p75, %p76
    %p78 = scmp.ne.s32.totalorder %s67, %s68
    %p79 = scmp.eq.s32.totalorder %s17, 0
    %p80 = por %p78, %p79
    %p81 = scmp.ne.s32.totalorder %s67, %s68
    %p82 = scmp.eq.s32.totalorder %s18, 1
    %p83 = por %p81, %p82
    %p85 = scmp.ne.s32.totalorder %s68, %s84
    %p86 = scmp.eq.s32.totalorder %s18, 0
    %p87 = por %p85, %p86
    %s88 = ssub.s32 %s19, %s31
    %s89 = ssub.s32 %s20, %s27
    %s90 = sor.u32 %s88, %s89
    %p91 = scmp.eq.s32.totalorder %s90, 0
    %s93 = sadd.s32 %s92, 1
    %s94 = scalar_select %p91, %s92, %s93
    %p97 = pneg %p91
    %p98 = scmp.eq.s32.totalorder %s12, 1
    %p99 = por %p97, %p98
    %p100 = scmp.ne.s32.totalorder %s92, %s95
    %p101 = scmp.eq.s32.totalorder %s12, 0
    %p102 = por %p100, %p101
    %p103 = scmp.ne.s32.totalorder %s92, %s95
    %p104 = scmp.eq.s32.totalorder %s17, 1
    %p105 = por %p103, %p104
    %p106 = scmp.ne.s32.totalorder %s95, %s96
    %p107 = scmp.eq.s32.totalorder %s17, 0
    %p108 = por %p106, %p107
    %p109 = scmp.ne.s32.totalorder %s95, %s96
    %p110 = scmp.eq.s32.totalorder %s18, 1
    %p111 = por %p109, %p110
    %p113 = scmp.ne.s32.totalorder %s96, %s112
    %p114 = scmp.eq.s32.totalorder %s18, 0
    %p115 = por %p113, %p114
    %s116 = ssub.s32 %s19, %s31
    %p117 = scmp.eq.s32.totalorder %s116, 0
    %s119 = sadd.s32 %s118, 1
    %s120 = scalar_select %p117, %s118, %s119
    %p123 = pneg %p117
    %p124 = scmp.eq.s32.totalorder %s12, 1
    %p125 = por %p123, %p124
    %p126 = scmp.ne.s32.totalorder %s118, %s121
    %p127 = scmp.eq.s32.totalorder %s12, 0
    %p128 = por %p126, %p127
    %p129 = scmp.ne.s32.totalorder %s118, %s121
    %p130 = scmp.eq.s32.totalorder %s17, 1
    %p131 = por %p129, %p130
    %p132 = scmp.ne.s32.totalorder %s121, %s122
    %p133 = scmp.eq.s32.totalorder %s17, 0
    %p134 = por %p132, %p133
    %p135 = scmp.ne.s32.totalorder %s121, %s122
    %p136 = scmp.eq.s32.totalorder %s18, 1
    %p137 = por %p135, %p136
    %p139 = scmp.ne.s32.totalorder %s122, %s138
    %p140 = scmp.eq.s32.totalorder %s18, 0
    %p141 = por %p139, %p140
    %s142 = ssub.s32 %s19, %s31
    %p143 = scmp.eq.s32.totalorder %s142, 0
    %s145 = sadd.s32 %s144, 1
    %s146 = scalar_select %p143, %s144, %s145
    %p149 = pneg %p143
    %p150 = scmp.eq.s32.totalorder %s12, 1
    %p151 = por %p149, %p150
    %p152 = scmp.ne.s32.totalorder %s144, %s147
    %p153 = scmp.eq.s32.totalorder %s12, 0
    %p154 = por %p152, %p153
    %p155 = scmp.ne.s32.totalorder %s144, %s147
    %p156 = scmp.eq.s32.totalorder %s17, 1
    %p157 = por %p155, %p156
    %p158 = scmp.ne.s32.totalorder %s147, %s148
    %p159 = scmp.eq.s32.totalorder %s17, 0
    %p160 = por %p158, %p159
    %p161 = scmp.ne.s32.totalorder %s147, %s148
    %p162 = scmp.eq.s32.totalorder %s18, 1
    %p163 = por %p161, %p162
    %p165 = scmp.ne.s32.totalorder %s148, %s164
    %p166 = scmp.eq.s32.totalorder %s18, 0
    %p167 = por %p165, %p166
    %s168 = ssub.s32 %s19, %s31
    %p169 = scmp.eq.s32.totalorder %s168, 0
    %s171 = sadd.s32 %s170, 1
    %s172 = scalar_select %p169, %s170, %s171
    %p175 = pneg %p169
    %p176 = scmp.eq.s32.totalorder %s12, 1
    %p177 = por %p175, %p176
    %p178 = scmp.ne.s32.totalorder %s170, %s173
    %p179 = scmp.eq.s32.totalorder %s12, 0
    %p180 = por %p178, %p179
    %p181 = scmp.ne.s32.totalorder %s170, %s173
    %p182 = scmp.eq.s32.totalorder %s17, 1
    %p183 = por %p181, %p182
    %p184 = scmp.ne.s32.totalorder %s173, %s174
    %p185 = scmp.eq.s32.totalorder %s17, 0
    %p186 = por %p184, %p185
    %p187 = scmp.ne.s32.totalorder %s173, %s174
    %p188 = scmp.eq.s32.totalorder %s18, 1
    %p189 = por %p187, %p188
    %p191 = scmp.ne.s32.totalorder %s174, %s190
    %p192 = scmp.eq.s32.totalorder %s18, 0
    %p193 = por %p191, %p192
    %p194 = scmp.le.s32.totalorder 1, %s12
    %p195 = scmp.lt.s32.totalorder %s12, 3
    %p196 = pnand %p194, %p195
    %p197 = pneg %p196
    // Predicated region
    $region9: #{dc_and_topk_loss.1} parent=5 // pred_check
      _
    $region10: #{dc_and_topk_loss.1} parent=5 // pred_check_branch
      %199 = sbr.rel (%p196) target = $region12
    $region11: #{dc_and_topk_loss.1} parent=5 // pred_region
      %s200 = ssub.s32 %s12, 1
    $region12: #{dc_and_topk_loss.1} parent=5 // pred_fallthru
      _
    %p201 = scmp.lt.s32.totalorder %s12, 2
    // Predicated region
    $region13: #{dc_and_topk_loss.1} parent=5 // pred_check
      %p202 = pneg %p201
    $region14: #{dc_and_topk_loss.1} parent=5 // pred_check_branch
      %204 = sbr.rel (%p202) target = $region16
    $region15: #{dc_and_topk_loss.1} parent=5 // pred_region
      // Predicated region
      $region17: #{dc_and_topk_loss.1} parent=15 // pred_check
        %p205 = pneg %p46
      $region18: #{dc_and_topk_loss.1} parent=15 // pred_check_branch
        %207 = sbr.rel (%p205) target = $region20
      $region19: #{dc_and_topk_loss.1} parent=15 // pred_region
        %s208 = smul.u32 2, %s20
        %p209 = scmp.lt.s32.totalorder %s19, 1
        %s210 = scalar_select %p209, %s19, 1
        %p211 = scmp.lt.s32.totalorder %s208, 1
        %s212 = scalar_select %p211, %s208, 1
        %s213 = smul.addr %s210, 2
        %s214 = sadd.s32 %s212, %s213
        %s215 = smul.addr %s214, 4
        %s216 = scalar_lea.vmem %s0, %s215
        %s217 = smul.u32 2, %s20
      $region20: #{dc_and_topk_loss.1} parent=15 // pred_fallthru
        _
      // Predicated region
      $region21: #{dc_and_topk_loss.1} parent=15 // pred_check
        %p218 = pneg %p74
      $region22: #{dc_and_topk_loss.1} parent=15 // pred_check_branch
        %220 = sbr.rel (%p218) target = $region24
      $region23: #{dc_and_topk_loss.1} parent=15 // pred_region
        %s221 = smul.u32 2, %s20
        %p222 = scmp.lt.s32.totalorder %s19, 1
        %s223 = scalar_select %p222, %s19, 1
        %p224 = scmp.lt.s32.totalorder %s221, 1
        %s225 = scalar_select %p224, %s221, 1
        %s226 = smul.addr %s223, 2
        %s227 = sadd.s32 %s225, %s226
        %s228 = scalar_lea.vmem %s1, %s227
        %s229 = smul.u32 2, %s20
      $region24: #{dc_and_topk_loss.1} parent=15 // pred_fallthru
        _
    $region16: #{dc_and_topk_loss.1} parent=5 // pred_fallthru
      _
    %p230 = scmp.le.s32.totalorder 1, %s12
    %p231 = scmp.lt.s32.totalorder %s12, 3
    %p232 = pnand %p230, %p231
    %p233 = pneg %p232
    // Predicated region
    $region25: #{dc_and_topk_loss.1} parent=5 // pred_check
      _
    $region26: #{dc_and_topk_loss.1} parent=5 // pred_check_branch
      %235 = sbr.rel (%p232) target = $region28
    $region27: #{dc_and_topk_loss.1} parent=5 // pred_region
      %s236 = ssub.s32 %s12, 1
      %s237 = smul.u32 2, %s22
      %p238 = scmp.lt.s32.totalorder %s21, 1
      %s239 = scalar_select %p238, %s21, 1
      %p240 = scmp.lt.s32.totalorder %s237, 1
      %s241 = scalar_select %p240, %s237, 1
      %s242 = smul.addr %s239, 2
      %s243 = sadd.s32 %s241, %s242
      %s244 = smul.addr %s243, 4
      %s245 = scalar_lea.vmem %s0, %s244
      %p246 = pneg %p52
      %p247 = pneg %p49
      %s248 = smul.u32 2, %s22
      %p249 = scmp.lt.s32.totalorder %s21, 1
      %s250 = scalar_select %p249, %s21, 1
      %p251 = scmp.lt.s32.totalorder %s248, 1
      %s252 = scalar_select %p251, %s248, 1
      %s253 = smul.addr %s250, 2
      %s254 = sadd.s32 %s252, %s253
      %s255 = scalar_lea.vmem %s1, %s254
      %p256 = pneg %p80
      %p257 = pneg %p77
      %p258 = pneg %p108
      %p259 = pneg %p105
      %s260 = smul.u32 2, %s22
      %p261 = scmp.lt.s32.totalorder %s21, 1
      %s262 = scalar_select %p261, %s21, 1
      %p263 = scmp.lt.s32.totalorder %s260, 1
      %s264 = scalar_select %p263, %s260, 1
      %s265 = smul.addr %s262, 2
      %s266 = sadd.s32 %s264, %s265
      %s267 = scalar_lea.vmem %s2, %s266
      %p268 = pneg %p134
      %p269 = pneg %p131
      %p270 = scmp.lt.s32.totalorder %s21, 1
      %s271 = scalar_select %p270, %s21, 1
      %s272 = smul.addr %s271, 4
      %s273 = scalar_lea.vmem %s3, %s272
      %p274 = pneg %p160
      %p275 = pneg %p157
      %p276 = scmp.lt.s32.totalorder %s21, 1
      %s277 = scalar_select %p276, %s21, 1
      %s278 = smul.addr %s277, 4
      %s279 = scalar_lea.vmem %s4, %s278
      %p280 = pneg %p186
      %p281 = pneg %p183
      %p282 = scmp.lt.s32.totalorder %s21, 1
      %s283 = scalar_select %p282, %s21, 1
      %s284 = smul.addr %s283, 4
      %s285 = scalar_lea.vmem %s5, %s284
      %s286 = smul.u32 2, %s22
      %p287 = scmp.lt.s32.totalorder %s21, 1
      %s288 = scalar_select %p287, %s21, 1
      %p289 = scmp.lt.s32.totalorder %s286, 1
      %s290 = scalar_select %p289, %s286, 1
      %s291 = smul.addr %s288, 2
      %s292 = sadd.s32 %s290, %s291
      %s293 = smul.addr %s292, 4
      %s294 = scalar_lea.vmem %s0, %s293
      %s295 = smul.u32 2, %s22
      %s296 = smul.u32 2, %s22
      %p297 = scmp.lt.s32.totalorder %s21, 1
      %s298 = scalar_select %p297, %s21, 1
      %p299 = scmp.lt.s32.totalorder %s296, 1
      %s300 = scalar_select %p299, %s296, 1
      %s301 = smul.addr %s298, 2
      %s302 = sadd.s32 %s300, %s301
      %s303 = scalar_lea.vmem %s1, %s302
      %s304 = smul.u32 2, %s22
      %s305 = smul.u32 2, %s22
      %p306 = scmp.lt.s32.totalorder %s21, 1
      %s307 = scalar_select %p306, %s21, 1
      %p308 = scmp.lt.s32.totalorder %s305, 1
      %s309 = scalar_select %p308, %s305, 1
      %s310 = smul.addr %s307, 2
      %s311 = sadd.s32 %s309, %s310
      %s312 = scalar_lea.vmem %s2, %s311
      %s313 = smul.u32 2, %s22
      %p314 = scmp.lt.s32.totalorder %s21, 1
      %s315 = scalar_select %p314, %s21, 1
      %s316 = smul.addr %s315, 4
      %s317 = scalar_lea.vmem %s3, %s316
      %p318 = scmp.lt.s32.totalorder %s21, 1
      %s319 = scalar_select %p318, %s21, 1
      %s320 = smul.addr %s319, 4
      %s321 = scalar_lea.vmem %s4, %s320
      %p322 = scmp.lt.s32.totalorder %s21, 1
      %s323 = scalar_select %p322, %s21, 1
      %s324 = smul.addr %s323, 4
      %s325 = scalar_lea.vmem %s5, %s324
      %p326 = scmp.eq.s32.totalorder %s22, 0
      // Predicated region
      $region29: #{dc_and_topk_loss.1} parent=27 // pred_check
        %p327 = pneg %p326
      $region30: #{dc_and_topk_loss.1} parent=27 // pred_check_branch
        %329 = sbr.rel (%p327) target = $region32
      $region31: #{dc_and_topk_loss.1} parent=27 // pred_region
        %330 = vst [vmem:[%s317] sm:$0xf] 0.0
        %331 = vst [vmem:[%s321] sm:$0xf] 0.0
        %332 = vst [vmem:[%s325] sm:$0xf] 0.0
      $region32: #{dc_and_topk_loss.1} parent=27 // pred_fallthru
        _
      %v333 = vld [vmem:[%s294] sm:$0xff]
      %v334 = vld [vmem:[%s303] sm:$0x3]
      %336 = vst [vmem:[#allocation1] ss:$2 sm:$0xff] %v333
      %v337 = vld.sshfl [vmem:[#allocation1] sm:$0xff pattern:$0x75316420]
      %v338 = vld.sshfl [vmem:[#allocation1 + $0x8] sm:$0xff pattern:$0x75316420]
      %vm341 = vcmask 1043456
      %v342 = vsel %vm341, %v337, -inf
      %v343 = vrot.slane %v342, 4
      %v344 = vmax.f32 %v342, %v343
      %v345 = vrot.slane %v344, 2
      %v346 = vmax.f32 %v344, %v345
      %v347 = vrot.slane %v346, 1
      %v348 = vmax.f32 %v346, %v347
      %v349 = vsel %vm341, %v338, -inf
      %v350 = vrot.slane %v349, 4
      %v351 = vmax.f32 %v349, %v350
      %v352 = vrot.slane %v351, 2
      %v353 = vmax.f32 %v351, %v352
      %v354 = vrot.slane %v353, 1
      %v355 = vmax.f32 %v353, %v354
      %v358 = vrot.slane %v355, 4
      %v359 = vsel %vm341, %v348, %v358
      %v361 = vsub.f32 %v333, %v359
      %v362 = vmul.f32 %v361, 1.442695
      %v363 = vpow.pop %v362
      %365 = vst [vmem:[#allocation1] ss:$2 sm:$0xff] %v363
      %v366 = vld.sshfl [vmem:[#allocation1] sm:$0xff pattern:$0x75316420]
      %v367 = vld.sshfl [vmem:[#allocation1 + $0x8] sm:$0xff pattern:$0x75316420]
      %v370 = vsel %vm341, %v366, 0.0
      %v371 = vrot.slane %v370, 4
      %v372 = vadd.f32 %v370, %v371
      %v373 = vrot.slane %v372, 2
      %v374 = vadd.f32 %v372, %v373
      %v375 = vrot.slane %v374, 1
      %v376 = vadd.f32 %v374, %v375
      %v377 = vsel %vm341, %v367, 0.0
      %v378 = vrot.slane %v377, 4
      %v379 = vadd.f32 %v377, %v378
      %v380 = vrot.slane %v379, 2
      %v381 = vadd.f32 %v379, %v380
      %v382 = vrot.slane %v381, 1
      %v383 = vadd.f32 %v381, %v382
      %v384 = vrcp.pop %v376
      %v385 = vrcp.pop %v383
      %v386 = vmul.f32 %v376, %v384
      %v387 = vmul.f32 %v383, %v385
      %v388 = vsub.f32 2.0, %v386
      %v389 = vsub.f32 2.0, %v387
      %v390 = vmul.f32 %v384, %v388
      %v391 = vmul.f32 %v385, %v389
      %v394 = vrot.slane %v391, 4
      %v395 = vsel %vm341, %v390, %v394
      %v397 = vmul.f32 %v363, %v395
      %v398 = vlaneseq
      %v399 = vshrl.u32 %v398, 7
      %v400 = vperm.slane %v334, 0
      %v401 = vperm.slane %v334, 1
      %vm402 = vcmp.eq.s32.totalorder %v399, %v400
      %vm403 = vcmp.eq.s32.totalorder %v399, %v401
      %v404 = vsel %vm402, 1, 0
      %v405 = vsel %vm403, 1, 0
      %v406 = vcvt.s32.f32 %v404
      %v407 = vcvt.s32.f32 %v405
      %v410 = vrot.slane %v407, 4
      %v411 = vsel %vm341, %v406, %v410
      %v413 = vmul.f32 %v397, %v411
      %v414 = vld [vmem:[%s317] sm:$0xf]
      %v416 = vrot.slane %v413, 4
      %v418 = vadd.f32 %v413, %v416
      %v419 = vadd.f32 %v414, %v418
      %420 = vst [vmem:[%s317] sm:$0xf] %v419
      %v421 = vld [vmem:[%s321] sm:$0xf]
      %v423 = vrot.slane %v397, 4
      %v425 = vadd.f32 %v397, %v423
      %v426 = vadd.f32 %v421, %v425
      %427 = vst [vmem:[%s321] sm:$0xf] %v426
      %v428 = vld [vmem:[%s325] sm:$0xf]
      %v429 = vadd.f32 %v406, %v407
      %v430 = vadd.f32 %v428, %v429
      %431 = vst [vmem:[%s325] sm:$0xf] %v430
      %v432 = vlog2.pop %v376
      %v433 = vmul.f32 %v432, 0.6931472
      %v434 = vlog2.pop %v383
      %v435 = vmul.f32 %v434, 0.6931472
      %v436 = vadd.f32 %v348, %v433
      %v437 = vadd.f32 %v355, %v435
      %v438 = vmul.f32 %v333, %v411
      %440 = vst [vmem:[#allocation1] ss:$2 sm:$0xff] %v438
      %v441 = vld.sshfl [vmem:[#allocation1] sm:$0xff pattern:$0x75316420]
      %v442 = vld.sshfl [vmem:[#allocation1 + $0x8] sm:$0xff pattern:$0x75316420]
      %v445 = vsel %vm341, %v441, 0.0
      %v446 = vrot.slane %v445, 4
      %v447 = vadd.f32 %v445, %v446
      %v448 = vrot.slane %v447, 2
      %v449 = vadd.f32 %v447, %v448
      %v450 = vrot.slane %v449, 1
      %v451 = vadd.f32 %v449, %v450
      %v452 = vsel %vm341, %v442, 0.0
      %v453 = vrot.slane %v452, 4
      %v454 = vadd.f32 %v452, %v453
      %v455 = vrot.slane %v454, 2
      %v456 = vadd.f32 %v454, %v455
      %v457 = vrot.slane %v456, 1
      %v458 = vadd.f32 %v456, %v457
      %v459 = vsub.f32 %v436, %v451
      %v460 = vsub.f32 %v437, %v458
      %v463 = vrot.slane %v460, 7
      %vm464 = vcmask 1040384
      %v465 = vsel %vm464, %v459, %v463
      %v467 = vlaneseq
      %vm468 = vcmp.ge.s32.totalorder %v467, 0
      %vm469 = vcmp.lt.s32.totalorder %v467, 256
      %vm470 = vmand %vm468, %vm469
      %471 = vst.msk [vmem:[%s312] sm:$0x3] %vm470, %v465
      %s472 = smul.u32 2, %s22
      %p473 = scmp.lt.s32.totalorder %s21, 1
      %s474 = scalar_select %p473, %s21, 1
      %p475 = scmp.lt.s32.totalorder %s472, 1
      %s476 = scalar_select %p475, %s472, 1
      %s477 = smul.addr %s474, 2
      %s478 = sadd.s32 %s476, %s477
      %s479 = scalar_lea.vmem %s2, %s478
      %p480 = scmp.lt.s32.totalorder %s21, 1
      %s481 = scalar_select %p480, %s21, 1
      %s482 = smul.addr %s481, 4
      %s483 = scalar_lea.vmem %s3, %s482
      %p484 = scmp.lt.s32.totalorder %s21, 1
      %s485 = scalar_select %p484, %s21, 1
      %s486 = smul.addr %s485, 4
      %s487 = scalar_lea.vmem %s4, %s486
      %p488 = scmp.lt.s32.totalorder %s21, 1
      %s489 = scalar_select %p488, %s21, 1
      %s490 = smul.addr %s489, 4
      %s491 = scalar_lea.vmem %s5, %s490
      // Predicated region
      $region33: #{dc_and_topk_loss.1} parent=27 // pred_check
        %p492 = pneg %p105
      $region34: #{dc_and_topk_loss.1} parent=27 // pred_check_branch
        %494 = sbr.rel (%p492) target = $region36
      $region35: #{dc_and_topk_loss.1} parent=27 // pred_region
        %s495 = smul.u32 2, %s22
      $region36: #{dc_and_topk_loss.1} parent=27 // pred_fallthru
        _
      // Predicated region
      $region37: #{dc_and_topk_loss.1} parent=27 // pred_check
        %p496 = pneg %p131
      $region38: #{dc_and_topk_loss.1} parent=27 // pred_check_branch
        %498 = sbr.rel (%p496) target = $region40
      $region39: #{dc_and_topk_loss.1} parent=27 // pred_region
        _
      $region40: #{dc_and_topk_loss.1} parent=27 // pred_fallthru
        _
      // Predicated region
      $region41: #{dc_and_topk_loss.1} parent=27 // pred_check
        %p499 = pneg %p157
      $region42: #{dc_and_topk_loss.1} parent=27 // pred_check_branch
        %501 = sbr.rel (%p499) target = $region44
      $region43: #{dc_and_topk_loss.1} parent=27 // pred_region
        _
      $region44: #{dc_and_topk_loss.1} parent=27 // pred_fallthru
        _
      // Predicated region
      $region45: #{dc_and_topk_loss.1} parent=27 // pred_check
        %p502 = pneg %p183
      $region46: #{dc_and_topk_loss.1} parent=27 // pred_check_branch
        %504 = sbr.rel (%p502) target = $region48
      $region47: #{dc_and_topk_loss.1} parent=27 // pred_region
        _
      $region48: #{dc_and_topk_loss.1} parent=27 // pred_fallthru
        _
    $region28: #{dc_and_topk_loss.1} parent=5 // pred_fallthru
      _
    %p505 = scmp.le.s32.totalorder 2, %s12
    // Predicated region
    $region49: #{dc_and_topk_loss.1} parent=5 // pred_check
      %p506 = pneg %p505
    $region50: #{dc_and_topk_loss.1} parent=5 // pred_check_branch
      %508 = sbr.rel (%p506) target = $region52
    $region51: #{dc_and_topk_loss.1} parent=5 // pred_region
      %s509 = ssub.s32 %s12, 2
      // Predicated region
      $region53: #{dc_and_topk_loss.1} parent=51 // pred_check
        %p510 = pneg %p111
      $region54: #{dc_and_topk_loss.1} parent=51 // pred_check_branch
        %512 = sbr.rel (%p510) target = $region56
      $region55: #{dc_and_topk_loss.1} parent=51 // pred_region
        %s513 = smul.u32 2, %s24
        %p514 = scmp.lt.s32.totalorder %s23, 1
        %s515 = scalar_select %p514, %s23, 1
        %p516 = scmp.lt.s32.totalorder %s513, 1
        %s517 = scalar_select %p516, %s513, 1
        %s518 = smul.addr %s515, 2
        %s519 = sadd.s32 %s517, %s518
        %s520 = scalar_lea.vmem %s2, %s519
      $region56: #{dc_and_topk_loss.1} parent=51 // pred_fallthru
        _
      // Predicated region
      $region57: #{dc_and_topk_loss.1} parent=51 // pred_check
        %p521 = pneg %p137
      $region58: #{dc_and_topk_loss.1} parent=51 // pred_check_branch
        %523 = sbr.rel (%p521) target = $region60
      $region59: #{dc_and_topk_loss.1} parent=51 // pred_region
        %p524 = scmp.lt.s32.totalorder %s23, 1
        %s525 = scalar_select %p524, %s23, 1
        %s526 = smul.addr %s525, 4
        %s527 = scalar_lea.vmem %s3, %s526
      $region60: #{dc_and_topk_loss.1} parent=51 // pred_fallthru
        _
      // Predicated region
      $region61: #{dc_and_topk_loss.1} parent=51 // pred_check
        %p528 = pneg %p163
      $region62: #{dc_and_topk_loss.1} parent=51 // pred_check_branch
        %530 = sbr.rel (%p528) target = $region64
      $region63: #{dc_and_topk_loss.1} parent=51 // pred_region
        %p531 = scmp.lt.s32.totalorder %s23, 1
        %s532 = scalar_select %p531, %s23, 1
        %s533 = smul.addr %s532, 4
        %s534 = scalar_lea.vmem %s4, %s533
      $region64: #{dc_and_topk_loss.1} parent=51 // pred_fallthru
        _
      // Predicated region
      $region65: #{dc_and_topk_loss.1} parent=51 // pred_check
        %p535 = pneg %p189
      $region66: #{dc_and_topk_loss.1} parent=51 // pred_check_branch
        %537 = sbr.rel (%p535) target = $region68
      $region67: #{dc_and_topk_loss.1} parent=51 // pred_region
        %p538 = scmp.lt.s32.totalorder %s23, 1
        %s539 = scalar_select %p538, %s23, 1
        %s540 = smul.addr %s539, 4
        %s541 = scalar_lea.vmem %s5, %s540
      $region68: #{dc_and_topk_loss.1} parent=51 // pred_fallthru
        _
    $region52: #{dc_and_topk_loss.1} parent=5 // pred_fallthru
      _
  $region6: #{dc_and_topk_loss.1} parent=0 // loop_footer
    %s16 = sadd.s32 1, %s12
  $region7: #{dc_and_topk_loss.1} parent=0 // loop_footer_branch
    %11 = sbr.rel target = $region3
  $region8: #{dc_and_topk_loss.1} parent=0 // loop_exit
    _

</llo_original>
